<compile_context>
chip_gen: v6e
topology: v6e:2x2x1
jax: 0.10.0
libtpu: 0.0.40
codegen_flags: <defaults>
</compile_context>

<pallas_src>
from functools import partial

import jax
import jax.numpy as jnp
from jax import lax
from jax.experimental import pallas as pl
from jax.experimental.pallas import tpu as pltpu

_LANE = 128
_SUBLANE = 8


def _round_up(x, m):
    return ((x + m - 1) // m) * m


def _mlp_kernel(s_ref, a_ref, w1s_ref, w1a_ref, w2_ref, w3t_ref, b_ref, ot_ref):
    """One batch-tile of the fused 3-layer MLP.

    Per-tile shapes:
      s_ref   [TB, S]       states tile (caller's dtype)
      a_ref   [TB, A]       actions tile
      w1s_ref [S,  P]       W1 rows multiplying `states`   (matmul dtype)
      w1a_ref [A,  P]       W1 rows multiplying `actions`
      w2_ref  [P,  P]
      w3t_ref [SP, P]       W3 transposed (output features on sublanes)
      b_ref   [8+SP, P]     f32 biases: row0=b1, row1=b2, rows 8.. = b3 (lane 0)
      ot_ref  [SP, TB]      transposed, lane-dense-along-batch output tile
    """
    cdt = w1s_ref.dtype                 # matmul compute dtype (bf16 recommended)
    sp = w3t_ref.shape[0]

    s = s_ref[...].astype(cdt)
    a = a_ref[...].astype(cdt)

    # Layer 1: fused "concat" matmul:  [s|a] @ [W1s; W1a] == s@W1s + a@W1a
    h1 = (
        jnp.dot(s, w1s_ref[...], preferred_element_type=jnp.float32)
        + jnp.dot(a, w1a_ref[...], preferred_element_type=jnp.float32)
        + b_ref[0:1, :]
    )
    h1 = jnp.maximum(h1, 0.0)           # f32 elementwise (v5e-friendly)

    # Layer 2
    h2 = (
        jnp.dot(h1.astype(cdt), w2_ref[...], preferred_element_type=jnp.float32)
        + b_ref[1:2, :]
    )
    h2 = jnp.maximum(h2, 0.0)

    # Layer 3, computed directly in transposed form on the MXU (q@k^T pattern):
    #   out_t[j, b] = sum_k W3[k, j] * h2[b, k] + b3[j]
    ot = lax.dot_general(
        w3t_ref[...],
        h2.astype(cdt),
        dimension_numbers=(((1,), (1,)), ((), ())),
        preferred_element_type=jnp.float32,
    ) + b_ref[8:8 + sp, 0:1]
    ot_ref[...] = ot.astype(ot_ref.dtype)


@partial(jax.jit, static_argnames=("state_dim", "transposed_out"))
def one_step_model_fc_forward(states, actions, w1s, w1a, w2, w3t, bias, *,
                              state_dim, transposed_out=False):
    """Pallas implementation of OneStepModelFC.forward(states, actions).

    Returns [B, state_dim] (module semantics).  With transposed_out=True it
    returns the kernel's native lane-dense layout [round_up(state_dim,8), B]
    (rows >= state_dim are zero padding) with no extra XLA slice/transpose.
    """
    B, S = states.shape
    A = actions.shape[1]
    P = w2.shape[-1]                    # common padded lane width (mult of 128)
    SP = w3t.shape[0]                   # round_up(state_dim, 8)

    # ---- Batch tiling --------------------------------------------------
    # Small B: one tile (the call is launch/DMA-latency bound; splitting only
    # adds per-step overhead).  Large B: 128-aligned tiles up to ~2048 rows,
    # and at least 2 grid steps so the "parallel" batch axis can be sharded
    # across v7x's two TensorCores.  TB must be a multiple of 128 when tiling
    # because the transposed output tile has TB on the lane axis.
    if B <= 1024:
        TB = B
    else:
        n_steps = max(2, pl.cdiv(B, 2048))
        TB = _round_up(pl.cdiv(B, n_steps), _LANE)
    grid = (pl.cdiv(B, TB),)

    in_itm = jnp.dtype(states.dtype).itemsize
    w_itm = jnp.dtype(w2.dtype).itemsize
    cost = pl.CostEstimate(
        flops=int(2 * B * (S * P + A * P + P * P + P * SP)),
        transcendentals=0,
        bytes_accessed=int(
            B * (S + A) * in_itm
            + (w1s.size + w1a.size + w2.size + w3t.size) * w_itm
            + bias.size * 4
            + SP * B * 4
        ),
    )

    out_t = pl.pallas_call(
        _mlp_kernel,
        out_shape=jax.ShapeDtypeStruct((SP, B), jnp.float32),
        grid=grid,
        in_specs=[
            pl.BlockSpec((TB, S), lambda i: (i, 0)),            # states tile
            pl.BlockSpec((TB, A), lambda i: (i, 0)),            # actions tile
            pl.BlockSpec(tuple(w1s.shape), lambda i: (0, 0)),   # weights stay
            pl.BlockSpec(tuple(w1a.shape), lambda i: (0, 0)),   # resident across
            pl.BlockSpec(tuple(w2.shape), lambda i: (0, 0)),    # batch tiles
            pl.BlockSpec(tuple(w3t.shape), lambda i: (0, 0)),
            pl.BlockSpec(tuple(bias.shape), lambda i: (0, 0)),
        ],
        out_specs=pl.BlockSpec((SP, TB), lambda i: (0, i)),     # lane-dense out
        compiler_params=pltpu.CompilerParams(
            dimension_semantics=("parallel",),
            vmem_limit_bytes=32 * 1024 * 1024,
        ),
        cost_estimate=cost,
    )(states, actions, w1s, w1a, w2, w3t, bias)

    if transposed_out:
        return out_t
    # Module-semantics view [B, state_dim].  (Consumers that can read the
    # transposed compact layout should use transposed_out=True instead.)
    return out_t[:state_dim, :].T


def init_params(key, state_dim, ac_dim, hidden_sizes):
    """Raw params mirroring nn.Linear default init (uniform +/- 1/sqrt(fan_in)).

    Weights stored as [in_features, out_features] (transposed vs PyTorch).
    """
    dims = [state_dim + ac_dim] + list(hidden_sizes) + [state_dim]
    params = []
    for i in range(len(dims) - 1):
        fan_in, fan_out = dims[i], dims[i + 1]
        key, kw, kb = jax.random.split(key, 3)
        bound = 1.0 / jnp.sqrt(jnp.float32(fan_in))
        w = jax.random.uniform(kw, (fan_in, fan_out), jnp.float32, -bound, bound)
        b = jax.random.uniform(kb, (1, fan_out), jnp.float32, -bound, bound)
        params += [w, b]
    return tuple(params)


def pack_params(raw, state_dim, ac_dim, hidden_sizes, matmul_dtype=jnp.bfloat16):
    """One-time packing.

    W1 split into (states, actions) halves; hidden dims zero-padded to a common
    lane width P (multiple of 128); W3 stored transposed [SP, P] so the kernel
    can emit a compact transposed output; biases in one f32 slab [8+SP, P].
    bf16 matmul dtype is recommended on all TPU generations (f32 accumulate).
    """
    assert len(hidden_sizes) == 2, "kernel is specialized to two hidden layers"
    w1, b1, w2, b2, w3, b3 = raw
    H0, H1 = hidden_sizes
    P = _round_up(max(H0, H1, state_dim), _LANE)   # keep P=128-multiple; do NOT
    SP = _round_up(state_dim, _SUBLANE)            # widen for MXU fill (mem-bound)

    def pad2(a, rows, cols):
        r, c = a.shape
        return jnp.pad(a, ((0, rows - r), (0, cols - c)))

    w1s = pad2(w1[:state_dim, :], state_dim, P).astype(matmul_dtype)
    w1a = pad2(w1[state_dim:, :], ac_dim, P).astype(matmul_dtype)
    w2p = pad2(w2, P, P).astype(matmul_dtype)
    w3t = pad2(w3.T, SP, P).astype(matmul_dtype)   # [state_dim, H1] -> [SP, P]

    bias = jnp.zeros((8 + SP, P), jnp.float32)
    bias = bias.at[0, :H0].set(b1[0])
    bias = bias.at[1, :H1].set(b2[0])
    bias = bias.at[8:8 + state_dim, 0].set(b3[0])
    return dict(w1s=w1s, w1a=w1a, w2=w2p, w3t=w3t, bias=bias, state_dim=state_dim)


def reference_forward(states, actions, raw):
    """Plain-JAX reference for correctness checking."""
    x = jnp.concatenate([states, actions], axis=-1).astype(jnp.float32)
    w1, b1, w2, b2, w3, b3 = raw
    h1 = jnp.maximum(x @ w1 + b1, 0.0)
    h2 = jnp.maximum(h1 @ w2 + b2, 0.0)
    return h2 @ w3 + b3


if __name__ == "__main__":
    state_dim, ac_dim = 12, 4
    hidden_sizes = [32, 32]

    key = jax.random.PRNGKey(0)
    key, kp = jax.random.split(key)
    raw = init_params(kp, state_dim, ac_dim, hidden_sizes)

    packed_f32 = pack_params(raw, state_dim, ac_dim, hidden_sizes, jnp.float32)
    packed_bf16 = pack_params(raw, state_dim, ac_dim, hidden_sizes, jnp.bfloat16)

    # ---- small batch (latency path: single tile) ------------------------
    B = 8
    key, ks, ka = jax.random.split(key, 3)
    states = jax.random.normal(ks, (B, state_dim), jnp.float32)
    actions = jax.random.normal(ka, (B, ac_dim), jnp.float32)
    ref = reference_forward(states, actions, raw)

    out = jax.block_until_ready(
        one_step_model_fc_forward(states, actions, **packed_f32)
    )
    assert out.shape == (B, state_dim)
    assert jnp.allclose(out, ref, atol=1e-5, rtol=1e-5), "f32 mismatch vs reference"

    # bf16-matmul path (recommended default on v5e/v6e/v7x): bf16 dot inputs,
    # f32 accumulation, f32 bias/ReLU.  Tolerance reflects bf16 weight rounding.
    out_bf16 = jax.block_until_ready(
        one_step_model_fc_forward(states, actions, **packed_bf16)
    )
    assert jnp.allclose(out_bf16, ref, atol=1e-1, rtol=1e-1), "bf16 mismatch"

    # Native transposed lane-dense layout (no wrapper slice/transpose).
    out_t = jax.block_until_ready(
        one_step_model_fc_forward(states, actions, **packed_f32, transposed_out=True)
    )
    assert out_t.shape == (_round_up(state_dim, _SUBLANE), B)
    assert jnp.allclose(out_t[:state_dim, :].T, ref, atol=1e-5, rtol=1e-5)

    # ---- larger batch (multi-step grid, partial last tile) ---------------
    B2 = 2600  # not a multiple of the tile size -> exercises masked writeback
    key, ks2, ka2 = jax.random.split(key, 3)
    states2 = jax.random.normal(ks2, (B2, state_dim), jnp.float32)
    actions2 = jax.random.normal(ka2, (B2, ac_dim), jnp.float32)
    ref2 = reference_forward(states2, actions2, raw)
    out2 = jax.block_until_ready(
        one_step_model_fc_forward(states2, actions2, **packed_f32)
    )
    assert out2.shape == (B2, state_dim)
    assert jnp.allclose(out2, ref2, atol=1e-4, rtol=1e-4), "large-B mismatch"

    print("KERNEL_OK")
</pallas_src>

<mosaic_0001>
module attributes {stable_mosaic.version = 11 : i64} {
  func.func @_mlp_kernel(%arg0: i32, %arg1: memref<8x12xf32, #tpu.memory_space<vmem>>, %arg2: memref<8x4xf32, #tpu.memory_space<vmem>>, %arg3: memref<12x128xf32, #tpu.memory_space<vmem>>, %arg4: memref<4x128xf32, #tpu.memory_space<vmem>>, %arg5: memref<128x128xf32, #tpu.memory_space<vmem>>, %arg6: memref<16x128xf32, #tpu.memory_space<vmem>>, %arg7: memref<24x128xf32, #tpu.memory_space<vmem>>, %arg8: memref<16x8xf32, #tpu.memory_space<vmem>>) attributes {dimension_semantics = [#tpu.dimension_semantics<parallel>], iteration_bounds = array<i64: 1>, scalar_prefetch = 0 : i64, scratch_operands = 0 : i64, tpu.core_type = #tpu.core_type<tc>, window_params = [{transform_indices = @transform_0, window_bounds = array<i64: 8, 12>}, {transform_indices = @transform_1, window_bounds = array<i64: 8, 4>}, {pipeline_mode = #tpu.pipeline_mode<synchronous>, transform_indices = @transform_2, window_bounds = array<i64: 12, 128>}, {pipeline_mode = #tpu.pipeline_mode<synchronous>, transform_indices = @transform_3, window_bounds = array<i64: 4, 128>}, {pipeline_mode = #tpu.pipeline_mode<synchronous>, transform_indices = @transform_4, window_bounds = array<i64: 128, 128>}, {pipeline_mode = #tpu.pipeline_mode<synchronous>, transform_indices = @transform_5, window_bounds = array<i64: 16, 128>}, {pipeline_mode = #tpu.pipeline_mode<synchronous>, transform_indices = @transform_6, window_bounds = array<i64: 24, 128>}, {transform_indices = @transform_7, window_bounds = array<i64: 16, 8>}]} {
    %c0 = arith.constant 0 : index
    %c0_0 = arith.constant 0 : index
    %0 = vector.load %arg1[%c0, %c0_0] : memref<8x12xf32, #tpu.memory_space<vmem>>, vector<8x12xf32>
    %c0_1 = arith.constant 0 : index
    %c0_2 = arith.constant 0 : index
    %1 = vector.load %arg2[%c0_1, %c0_2] : memref<8x4xf32, #tpu.memory_space<vmem>>, vector<8x4xf32>
    %c0_3 = arith.constant 0 : index
    %c0_4 = arith.constant 0 : index
    %2 = vector.load %arg3[%c0_3, %c0_4] : memref<12x128xf32, #tpu.memory_space<vmem>>, vector<12x128xf32>
    %cst = arith.constant dense<0.000000e+00> : vector<8x128xf32>
    %3 = tpu.matmul %0, %2, %cst {dimension_numbers = #tpu.dot_dimension_numbers<[1], [0], [0], [1], [0, 0, 1, 1], [], []>} : vector<8x12xf32>, vector<12x128xf32>, vector<8x128xf32> -> vector<8x128xf32>
    %c0_5 = arith.constant 0 : index
    %c0_6 = arith.constant 0 : index
    %4 = vector.load %arg4[%c0_5, %c0_6] : memref<4x128xf32, #tpu.memory_space<vmem>>, vector<4x128xf32>
    %cst_7 = arith.constant dense<0.000000e+00> : vector<8x128xf32>
    %5 = tpu.matmul %1, %4, %cst_7 {dimension_numbers = #tpu.dot_dimension_numbers<[1], [0], [0], [1], [0, 0, 1, 1], [], []>} : vector<8x4xf32>, vector<4x128xf32>, vector<8x128xf32> -> vector<8x128xf32>
    %6 = arith.addf %3, %5 : vector<8x128xf32>
    %c0_8 = arith.constant 0 : index
    %c0_9 = arith.constant 0 : index
    %7 = vector.load %arg7[%c0_8, %c0_9] : memref<24x128xf32, #tpu.memory_space<vmem>>, vector<1x128xf32>
    %8 = vector.broadcast %7 : vector<1x128xf32> to vector<8x128xf32>
    %9 = arith.addf %6, %8 : vector<8x128xf32>
    %cst_10 = arith.constant 0.000000e+00 : f32
    %10 = vector.broadcast %cst_10 : f32 to vector<8x128xf32>
    %11 = arith.maximumf %9, %10 : vector<8x128xf32>
    %c0_11 = arith.constant 0 : index
    %c0_12 = arith.constant 0 : index
    %12 = vector.load %arg5[%c0_11, %c0_12] : memref<128x128xf32, #tpu.memory_space<vmem>>, vector<128x128xf32>
    %cst_13 = arith.constant dense<0.000000e+00> : vector<8x128xf32>
    %13 = tpu.matmul %11, %12, %cst_13 {dimension_numbers = #tpu.dot_dimension_numbers<[1], [0], [0], [1], [0, 0, 1, 1], [], []>} : vector<8x128xf32>, vector<128x128xf32>, vector<8x128xf32> -> vector<8x128xf32>
    %c1 = arith.constant 1 : index
    %c0_14 = arith.constant 0 : index
    %14 = vector.load %arg7[%c1, %c0_14] : memref<24x128xf32, #tpu.memory_space<vmem>>, vector<1x128xf32>
    %15 = vector.broadcast %14 : vector<1x128xf32> to vector<8x128xf32>
    %16 = arith.addf %13, %15 : vector<8x128xf32>
    %cst_15 = arith.constant 0.000000e+00 : f32
    %17 = vector.broadcast %cst_15 : f32 to vector<8x128xf32>
    %18 = arith.maximumf %16, %17 : vector<8x128xf32>
    %c0_16 = arith.constant 0 : index
    %c0_17 = arith.constant 0 : index
    %19 = vector.load %arg6[%c0_16, %c0_17] : memref<16x128xf32, #tpu.memory_space<vmem>>, vector<16x128xf32>
    %cst_18 = arith.constant dense<0.000000e+00> : vector<16x8xf32>
    %20 = tpu.matmul %19, %18, %cst_18 {dimension_numbers = #tpu.dot_dimension_numbers<[1], [1], [0], [0], [0, 0, 1, 0], [], []>} : vector<16x128xf32>, vector<8x128xf32>, vector<16x8xf32> -> vector<16x8xf32>
    %c8 = arith.constant 8 : index
    %c0_19 = arith.constant 0 : index
    %21 = vector.load %arg7[%c8, %c0_19] : memref<24x128xf32, #tpu.memory_space<vmem>>, vector<16x1xf32>
    %22 = vector.broadcast %21 : vector<16x1xf32> to vector<16x8xf32>
    %23 = arith.addf %20, %22 : vector<16x8xf32>
    %c0_20 = arith.constant 0 : index
    %c0_21 = arith.constant 0 : index
    %24 = vector.load %arg8[%c0_20, %c0_21] : memref<16x8xf32, #tpu.memory_space<vmem>>, vector<16x8xf32>
    tpu.vector_store %arg8[%c0_20, %c0_21], %23 {strides = array<i32>} : memref<16x8xf32, #tpu.memory_space<vmem>>, vector<16x8xf32>,
    return
  }
  func.func @transform_0(%arg0: i32) -> (i32, i32) {
    %c0_i32 = arith.constant 0 : i32
    %c0_i32_0 = arith.constant 0 : i32
    return %arg0, %c0_i32 : i32, i32
  }
  func.func @transform_1(%arg0: i32) -> (i32, i32) {
    %c0_i32 = arith.constant 0 : i32
    %c0_i32_0 = arith.constant 0 : i32
    return %arg0, %c0_i32 : i32, i32
  }
  func.func @transform_2(%arg0: i32) -> (i32, i32) {
    %c0_i32 = arith.constant 0 : i32
    %c0_i32_0 = arith.constant 0 : i32
    %c0_i32_1 = arith.constant 0 : i32
    return %c0_i32, %c0_i32_0 : i32, i32
  }
  func.func @transform_3(%arg0: i32) -> (i32, i32) {
    %c0_i32 = arith.constant 0 : i32
    %c0_i32_0 = arith.constant 0 : i32
    %c0_i32_1 = arith.constant 0 : i32
    return %c0_i32, %c0_i32_0 : i32, i32
  }
  func.func @transform_4(%arg0: i32) -> (i32, i32) {
    %c0_i32 = arith.constant 0 : i32
    %c0_i32_0 = arith.constant 0 : i32
    %c0_i32_1 = arith.constant 0 : i32
    return %c0_i32, %c0_i32_0 : i32, i32
  }
  func.func @transform_5(%arg0: i32) -> (i32, i32) {
    %c0_i32 = arith.constant 0 : i32
    %c0_i32_0 = arith.constant 0 : i32
    %c0_i32_1 = arith.constant 0 : i32
    return %c0_i32, %c0_i32_0 : i32, i32
  }
  func.func @transform_6(%arg0: i32) -> (i32, i32) {
    %c0_i32 = arith.constant 0 : i32
    %c0_i32_0 = arith.constant 0 : i32
    %c0_i32_1 = arith.constant 0 : i32
    return %c0_i32, %c0_i32_0 : i32, i32
  }
  func.func @transform_7(%arg0: i32) -> (i32, i32) {
    %c0_i32 = arith.constant 0 : i32
    %c0_i32_0 = arith.constant 0 : i32
    return %c0_i32, %arg0 : i32, i32
  }
}

</mosaic_0001>

<llo_original>
// kernel: one_step_model_fc_forward.1
$region0: #{one_step_model_fc_forward.1}
  #allocation0 [shape = 'u32[]', space=smem, size = 0x4, offset = 0x4, fixed_abs, tag = 'smem constant byte address 0x4 - core index']
  #allocation1 [shape = 'u32[144,128]{1,0:T(1,128)}', space=vmem, size = 0x12000, scoped, tag = 'internal scratch']
  %s0 = inlined_call_operand.hbm [shape: f32[8,12], index: 0, kind: input, shape index: {}]
  %s1 = inlined_call_operand.vmem [shape: f32[8,4], index: 1, kind: input, shape index: {}]
  %s2 = inlined_call_operand.vmem [shape: f32[12,128], index: 2, kind: input, shape index: {}]
  %s3 = inlined_call_operand.hbm [shape: f32[4,128], index: 3, kind: input, shape index: {}]
  %s4 = inlined_call_operand.hbm [shape: f32[128,128], index: 4, kind: input, shape index: {}]
  %s5 = inlined_call_operand.hbm [shape: f32[16,128], index: 5, kind: input, shape index: {}]
  %s6 = inlined_call_operand.hbm [shape: f32[24,128], index: 6, kind: input, shape index: {}]
  %s7 = inlined_call_operand.vmem [shape: f32[16,8], index: 7, kind: output, shape index: {}]
  %s8 = sld [smem:[#allocation0]]
  $region58: #{one_step_model_fc_forward.1} parent=0
    _
  %s10 = ssub.s32 1, %s8
  %s11 = scalar_select 0, %s10, %s8
  $region1: #{one_step_model_fc_forward.1} parent=0
    #allocation2 [shape = 'u8[4096]{0}', space=vmem, size = 0x1000, scoped, tag = 'input window, operand 0, single buffered']
    #allocation3 [shape = 's32[1]{0}', space=sflag, size = 0x4, scoped, tag = 'scoped memory for one_step_model_fc_forward.1']
    #allocation4 [shape = 'u8[2048]{0}', space=vmem, size = 0x800, scoped, tag = 'input window, operand 3, single buffered']
    #allocation5 [shape = 's32[1]{0}', space=sflag, size = 0x4, scoped, tag = 'scoped memory for one_step_model_fc_forward.1']
    #allocation6 [shape = 'u8[65536]{0}', space=vmem, size = 0x10000, scoped, tag = 'input window, operand 4, single buffered']
    #allocation7 [shape = 'u8[8192]{0}', space=vmem, size = 0x2000, scoped, tag = 'input window, operand 5, single buffered']
    #allocation8 [shape = 's32[1]{0}', space=sflag, size = 0x4, scoped, tag = 'scoped memory for one_step_model_fc_forward.1']
    #allocation9 [shape = 'u8[12288]{0}', space=vmem, size = 0x3000, scoped, tag = 'input window, operand 6, single buffered']
    %12 = vsyncpa [#allocation3], 0
    %13 = vsyncpa [#allocation5], 0
    %14 = vsyncpa [#allocation8], 0
    // Predicated region
    $region2: #{one_step_model_fc_forward.1} parent=1 // pred_check
      _
    $region3: #{one_step_model_fc_forward.1} parent=1 // pred_check_branch
      %16 = sbr.rel (0) target = $region5
    $region4: #{one_step_model_fc_forward.1} parent=1 // pred_region
      %s18 = ssub.s32 128, 128
      %19 = vsyncadd [#allocation3], %s18
      %s21 = sshll.u32 [#allocation2], 4
      %s22 = int_to_ptr.vmem [resolvable:$true] %s21
      %24 = dma.hbm_to_vmem [thread:$0]  %s0, 128, %s22, [#allocation3]
    $region5: #{one_step_model_fc_forward.1} parent=1 // pred_fallthru
      _
    // Predicated region
    $region6: #{one_step_model_fc_forward.1} parent=1 // pred_check
      _
    $region7: #{one_step_model_fc_forward.1} parent=1 // pred_check_branch
      %26 = sbr.rel (0) target = $region9
    $region8: #{one_step_model_fc_forward.1} parent=1 // pred_region
      _
    $region9: #{one_step_model_fc_forward.1} parent=1 // pred_fallthru
      _
    // Predicated region
    $region10: #{one_step_model_fc_forward.1} parent=1 // pred_check
      _
    $region11: #{one_step_model_fc_forward.1} parent=1 // pred_check_branch
      %28 = sbr.rel (0) target = $region13
    $region12: #{one_step_model_fc_forward.1} parent=1 // pred_region
      _
    $region13: #{one_step_model_fc_forward.1} parent=1 // pred_fallthru
      _
    // Predicated region
    $region14: #{one_step_model_fc_forward.1} parent=1 // pred_check
      _
    $region15: #{one_step_model_fc_forward.1} parent=1 // pred_check_branch
      %30 = sbr.rel (0) target = $region17
    $region16: #{one_step_model_fc_forward.1} parent=1 // pred_region
      %s32 = ssub.s32 64, 64
      %33 = vsyncadd [#allocation5], %s32
      %s35 = sshll.u32 [#allocation4], 4
      %s36 = int_to_ptr.vmem [resolvable:$true] %s35
      %38 = dma.hbm_to_vmem [thread:$0]  %s3, 64, %s36, [#allocation5]
    $region17: #{one_step_model_fc_forward.1} parent=1 // pred_fallthru
      _
    // Predicated region
    $region18: #{one_step_model_fc_forward.1} parent=1 // pred_check
      _
    $region19: #{one_step_model_fc_forward.1} parent=1 // pred_check_branch
      %40 = sbr.rel (0) target = $region21
    $region20: #{one_step_model_fc_forward.1} parent=1 // pred_region
      %s42 = ssub.s32 2048, 2048
      %43 = vsyncadd [#allocation5], %s42
      %s44 = sshll.u32 [#allocation6], 4
      %s45 = int_to_ptr.vmem [resolvable:$true] %s44
      %50 = dma.hbm_to_vmem [thread:$0]  %s4, 2048, %s45, [#allocation5], 128, 128, 8
    $region21: #{one_step_model_fc_forward.1} parent=1 // pred_fallthru
      _
    // Predicated region
    $region22: #{one_step_model_fc_forward.1} parent=1 // pred_check
      _
    $region23: #{one_step_model_fc_forward.1} parent=1 // pred_check_branch
      %52 = sbr.rel (0) target = $region25
    $region24: #{one_step_model_fc_forward.1} parent=1 // pred_region
      %s54 = ssub.s32 256, 256
      %55 = vsyncadd [#allocation8], %s54
      %s56 = sshll.u32 [#allocation7], 4
      %s57 = int_to_ptr.vmem [resolvable:$true] %s56
      %62 = dma.hbm_to_vmem [thread:$0]  %s5, 256, %s57, [#allocation8], 128, 128, 8
    $region25: #{one_step_model_fc_forward.1} parent=1 // pred_fallthru
      _
    // Predicated region
    $region26: #{one_step_model_fc_forward.1} parent=1 // pred_check
      _
    $region27: #{one_step_model_fc_forward.1} parent=1 // pred_check_branch
      %64 = sbr.rel (0) target = $region29
    $region28: #{one_step_model_fc_forward.1} parent=1 // pred_region
      %s66 = ssub.s32 384, 384
      %67 = vsyncadd [#allocation8], %s66
      %s68 = sshll.u32 [#allocation9], 4
      %s69 = int_to_ptr.vmem [resolvable:$true] %s68
      %74 = dma.hbm_to_vmem [thread:$0]  %s6, 384, %s69, [#allocation8], 128, 128, 8
    $region29: #{one_step_model_fc_forward.1} parent=1 // pred_fallthru
      _
    // Predicated region
    $region30: #{one_step_model_fc_forward.1} parent=1 // pred_check
      _
    $region31: #{one_step_model_fc_forward.1} parent=1 // pred_check_branch
      %76 = sbr.rel (0) target = $region33
    $region32: #{one_step_model_fc_forward.1} parent=1 // pred_region
      %77 = dma.done [#allocation3], 128
    $region33: #{one_step_model_fc_forward.1} parent=1 // pred_fallthru
      _
    // Predicated region
    $region34: #{one_step_model_fc_forward.1} parent=1 // pred_check
      _
    $region35: #{one_step_model_fc_forward.1} parent=1 // pred_check_branch
      %79 = sbr.rel (0) target = $region37
    $region36: #{one_step_model_fc_forward.1} parent=1 // pred_region
      %80 = dma.done [#allocation5], 64
    $region37: #{one_step_model_fc_forward.1} parent=1 // pred_fallthru
      _
    // Predicated region
    $region38: #{one_step_model_fc_forward.1} parent=1 // pred_check
      _
    $region39: #{one_step_model_fc_forward.1} parent=1 // pred_check_branch
      %82 = sbr.rel (0) target = $region41
    $region40: #{one_step_model_fc_forward.1} parent=1 // pred_region
      %83 = dma.done [#allocation5], 2048
    $region41: #{one_step_model_fc_forward.1} parent=1 // pred_fallthru
      _
    // Predicated region
    $region42: #{one_step_model_fc_forward.1} parent=1 // pred_check
      _
    $region43: #{one_step_model_fc_forward.1} parent=1 // pred_check_branch
      %85 = sbr.rel (0) target = $region45
    $region44: #{one_step_model_fc_forward.1} parent=1 // pred_region
      %86 = dma.done [#allocation8], 256
    $region45: #{one_step_model_fc_forward.1} parent=1 // pred_fallthru
      _
    // Predicated region
    $region46: #{one_step_model_fc_forward.1} parent=1 // pred_check
      _
    $region47: #{one_step_model_fc_forward.1} parent=1 // pred_check_branch
      %88 = sbr.rel (0) target = $region49
    $region48: #{one_step_model_fc_forward.1} parent=1 // pred_region
      %89 = dma.done [#allocation8], 384
    $region49: #{one_step_model_fc_forward.1} parent=1 // pred_fallthru
      _
    %v90 = vld [vmem:[#allocation2] sm:$0xff]
    %v91 = vld [vmem:[%s1] sm:$0xff]
    %v92 = vld [vmem:[%s2] sm:$0xff]
    %v93 = vld [vmem:[%s2 + $0x8] sm:$0xf]
    %v94 = vld [vmem:[#allocation4] sm:$0xf]
    %vm95 = vcmask 31744
    %v97 = vsel %vm95, %v91, 0
    %vm99 = vcmask 1043456
    %v101 = vsel %vm99, %v94, 0
    %103 = vmatprep.subr.mxu0 0.0
    %104 = vmatpush1.msra.mxu0 0.0
    %105 = vmatprep.subr.mxu0 0.0
    %106 = vmatpush1.msra.mxu0 0.0
    %107 = vmatprep.subr.mxu0 0.0
    %108 = vmatpush1.msra.mxu0 0.0
    %109 = vmatprep.subr.mxu0 0.0
    %110 = vmatpush1.msra.mxu0 0.0
    %111 = vmatprep.subr.mxu0 0.0
    %112 = vmatpush1.msra.mxu0 0.0
    %113 = vmatprep.subr.mxu0 0.0
    %114 = vmatpush1.msra.mxu0 0.0
    %115 = vmatprep.subr.mxu0 0.0
    %116 = vmatpush1.msra.mxu0 0.0
    %117 = vmatprep.subr.mxu0 0.0
    %118 = vmatpush1.msra.mxu0 0.0
    %119 = vmatprep.subr.mxu0 0.0
    %120 = vmatpush1.msra.mxu0 0.0
    %121 = vmatprep.subr.mxu0 0.0
    %122 = vmatpush1.msra.mxu0 0.0
    %123 = vmatprep.subr.mxu0 0.0
    %124 = vmatpush1.msra.mxu0 0.0
    %125 = vmatprep.subr.mxu0 0.0
    %126 = vmatpush1.msra.mxu0 0.0
    %127 = vmatprep.subr.mxu0 0.0
    %128 = vmatpush1.msra.mxu0 0.0
    %129 = vmatprep.subr.mxu0 0.0
    %130 = vmatpush1.msra.mxu0 0.0
    %131 = vmatprep.subr.mxu0 0.0
    %132 = vmatpush1.msra.mxu0 0.0
    %133 = vmatprep.subr.mxu0 0.0
    %134 = vmatpush1.msra.mxu0 %v101
    %135 = vmatprep.subr.mxu0 0.0
    %136 = vmatpush2.msra.mxu0 0.0
    %137 = vmatprep.subr.mxu0 0.0
    %138 = vmatpush2.msra.mxu0 0.0
    %139 = vmatprep.subr.mxu0 0.0
    %140 = vmatpush2.msra.mxu0 0.0
    %141 = vmatprep.subr.mxu0 0.0
    %142 = vmatpush2.msra.mxu0 0.0
    %143 = vmatprep.subr.mxu0 0.0
    %144 = vmatpush2.msra.mxu0 0.0
    %145 = vmatprep.subr.mxu0 0.0
    %146 = vmatpush2.msra.mxu0 0.0
    %147 = vmatprep.subr.mxu0 0.0
    %148 = vmatpush2.msra.mxu0 0.0
    %149 = vmatprep.subr.mxu0 0.0
    %150 = vmatpush2.msra.mxu0 0.0
    %151 = vmatprep.subr.mxu0 0.0
    %152 = vmatpush2.msra.mxu0 0.0
    %153 = vmatprep.subr.mxu0 0.0
    %154 = vmatpush2.msra.mxu0 0.0
    %155 = vmatprep.subr.mxu0 0.0
    %156 = vmatpush2.msra.mxu0 0.0
    %157 = vmatprep.subr.mxu0 0.0
    %158 = vmatpush2.msra.mxu0 0.0
    %159 = vmatprep.subr.mxu0 0.0
    %160 = vmatpush2.msra.mxu0 0.0
    %161 = vmatprep.subr.mxu0 0.0
    %162 = vmatpush2.msra.mxu0 0.0
    %163 = vmatprep.subr.mxu0 0.0
    %164 = vmatpush2.msra.mxu0 0.0
    %165 = vmatprep.subr.mxu0 0.0
    %166 = vmatpush2.msra.mxu0 0.0
    %167 = vmatprep.mubr.f32.mxu0 0.0
    %168 = vmatmul.mubr.f32.gmra.mxu0 %v97
    %v169 = vpop.f32.mrf.mxu0
    %v170 = vadd.f32 0.0, %v169
    %v171 = vpop.f32.mrf.mxu0
    %172 = vdwg.mxu0
    %vm173 = vcmask 97280
    %v175 = vsel %vm173, %v90, 0
    %v178 = vsel %vm99, %v93, 0
    %180 = vmatprep.subr.mxu0 0.0
    %181 = vmatpush1.msra.mxu0 0.0
    %182 = vmatprep.subr.mxu0 0.0
    %183 = vmatpush1.msra.mxu0 0.0
    %184 = vmatprep.subr.mxu0 0.0
    %185 = vmatpush1.msra.mxu0 0.0
    %186 = vmatprep.subr.mxu0 0.0
    %187 = vmatpush1.msra.mxu0 0.0
    %188 = vmatprep.subr.mxu0 0.0
    %189 = vmatpush1.msra.mxu0 0.0
    %190 = vmatprep.subr.mxu0 0.0
    %191 = vmatpush1.msra.mxu0 0.0
    %192 = vmatprep.subr.mxu0 0.0
    %193 = vmatpush1.msra.mxu0 0.0
    %194 = vmatprep.subr.mxu0 0.0
    %195 = vmatpush1.msra.mxu0 0.0
    %196 = vmatprep.subr.mxu0 0.0
    %197 = vmatpush1.msra.mxu0 0.0
    %198 = vmatprep.subr.mxu0 0.0
    %199 = vmatpush1.msra.mxu0 0.0
    %200 = vmatprep.subr.mxu0 0.0
    %201 = vmatpush1.msra.mxu0 0.0
    %202 = vmatprep.subr.mxu0 0.0
    %203 = vmatpush1.msra.mxu0 0.0
    %204 = vmatprep.subr.mxu0 0.0
    %205 = vmatpush1.msra.mxu0 0.0
    %206 = vmatprep.subr.mxu0 0.0
    %207 = vmatpush1.msra.mxu0 0.0
    %208 = vmatprep.subr.mxu0 0.0
    %209 = vmatpush1.msra.mxu0 %v178
    %210 = vmatprep.subr.mxu0 0.0
    %211 = vmatpush1.msra.mxu0 %v92
    %212 = vmatprep.subr.mxu0 0.0
    %213 = vmatpush2.msra.mxu0 0.0
    %214 = vmatprep.subr.mxu0 0.0
    %215 = vmatpush2.msra.mxu0 0.0
    %216 = vmatprep.subr.mxu0 0.0
    %217 = vmatpush2.msra.mxu0 0.0
    %218 = vmatprep.subr.mxu0 0.0
    %219 = vmatpush2.msra.mxu0 0.0
    %220 = vmatprep.subr.mxu0 0.0
    %221 = vmatpush2.msra.mxu0 0.0
    %222 = vmatprep.subr.mxu0 0.0
    %223 = vmatpush2.msra.mxu0 0.0
    %224 = vmatprep.subr.mxu0 0.0
    %225 = vmatpush2.msra.mxu0 0.0
    %226 = vmatprep.subr.mxu0 0.0
    %227 = vmatpush2.msra.mxu0 0.0
    %228 = vmatprep.subr.mxu0 0.0
    %229 = vmatpush2.msra.mxu0 0.0
    %230 = vmatprep.subr.mxu0 0.0
    %231 = vmatpush2.msra.mxu0 0.0
    %232 = vmatprep.subr.mxu0 0.0
    %233 = vmatpush2.msra.mxu0 0.0
    %234 = vmatprep.subr.mxu0 0.0
    %235 = vmatpush2.msra.mxu0 0.0
    %236 = vmatprep.subr.mxu0 0.0
    %237 = vmatpush2.msra.mxu0 0.0
    %238 = vmatprep.subr.mxu0 0.0
    %239 = vmatpush2.msra.mxu0 0.0
    %240 = vmatprep.subr.mxu0 0.0
    %241 = vmatpush2.msra.mxu0 0.0
    %242 = vmatprep.subr.mxu0 0.0
    %243 = vmatpush2.msra.mxu0 0.0
    %244 = vmatprep.mubr.f32.mxu0 0.0
    %245 = vmatmul.mubr.f32.gmra.mxu0 %v175
    %v246 = vpop.f32.mrf.mxu0
    %v247 = vadd.f32 %v170, %v246
    %v248 = vpop.f32.mrf.mxu0
    %249 = vdwg.mxu0
    %v250 = vld [vmem:[#allocation9] sm:$0x1]
    %v251 = vlaneseq
    %v252 = vshrl.u32 %v251, 7
    %v253 = vsub.s32 0, %v252
    %v254 = vrot.slane %v250, %v253
    %v255 = vadd.f32 %v247, %v254
    %v256 = vmax.f32 %v255, 0.0
    %v257 = vld [vmem:[#allocation6] sm:$0xff]
    %v258 = vld [vmem:[#allocation6 + $0x8] sm:$0xff]
    %v259 = vld [vmem:[#allocation6 + $0x10] sm:$0xff]
    %v260 = vld [vmem:[#allocation6 + $0x18] sm:$0xff]
    %v261 = vld [vmem:[#allocation6 + $0x20] sm:$0xff]
    %v262 = vld [vmem:[#allocation6 + $0x28] sm:$0xff]
    %v263 = vld [vmem:[#allocation6 + $0x30] sm:$0xff]
    %v264 = vld [vmem:[#allocation6 + $0x38] sm:$0xff]
    %v265 = vld [vmem:[#allocation6 + $0x40] sm:$0xff]
    %v266 = vld [vmem:[#allocation6 + $0x48] sm:$0xff]
    %v267 = vld [vmem:[#allocation6 + $0x50] sm:$0xff]
    %v268 = vld [vmem:[#allocation6 + $0x58] sm:$0xff]
    %v269 = vld [vmem:[#allocation6 + $0x60] sm:$0xff]
    %v270 = vld [vmem:[#allocation6 + $0x68] sm:$0xff]
    %v271 = vld [vmem:[#allocation6 + $0x70] sm:$0xff]
    %v272 = vld [vmem:[#allocation6 + $0x78] sm:$0xff]
    %v273 = vld [vmem:[#allocation9 + $0x1] sm:$0x1]
    %v274 = vlaneseq
    %v275 = vshrl.u32 %v274, 7
    %v276 = vsub.s32 0, %v275
    %v277 = vrot.slane %v273, %v276
    %278 = vmatprep.subr.mxu0 0.0
    %279 = vmatpush1.msra.mxu0 %v272
    %280 = vmatprep.subr.mxu0 0.0
    %281 = vmatpush1.msra.mxu0 %v271
    %282 = vmatprep.subr.mxu0 0.0
    %283 = vmatpush1.msra.mxu0 %v270
    %284 = vmatprep.subr.mxu0 0.0
    %285 = vmatpush1.msra.mxu0 %v269
    %286 = vmatprep.subr.mxu0 0.0
    %287 = vmatpush1.msra.mxu0 %v268
    %288 = vmatprep.subr.mxu0 0.0
    %289 = vmatpush1.msra.mxu0 %v267
    %290 = vmatprep.subr.mxu0 0.0
    %291 = vmatpush1.msra.mxu0 %v266
    %292 = vmatprep.subr.mxu0 0.0
    %293 = vmatpush1.msra.mxu0 %v265
    %294 = vmatprep.subr.mxu0 0.0
    %295 = vmatpush1.msra.mxu0 %v264
    %296 = vmatprep.subr.mxu0 0.0
    %297 = vmatpush1.msra.mxu0 %v263
    %298 = vmatprep.subr.mxu0 0.0
    %299 = vmatpush1.msra.mxu0 %v262
    %300 = vmatprep.subr.mxu0 0.0
    %301 = vmatpush1.msra.mxu0 %v261
    %302 = vmatprep.subr.mxu0 0.0
    %303 = vmatpush1.msra.mxu0 %v260
    %304 = vmatprep.subr.mxu0 0.0
    %305 = vmatpush1.msra.mxu0 %v259
    %306 = vmatprep.subr.mxu0 0.0
    %307 = vmatpush1.msra.mxu0 %v258
    %308 = vmatprep.subr.mxu0 0.0
    %309 = vmatpush1.msra.mxu0 %v257
    %310 = vmatprep.subr.mxu0 0.0
    %311 = vmatpush2.msra.mxu0 0.0
    %312 = vmatprep.subr.mxu0 0.0
    %313 = vmatpush2.msra.mxu0 0.0
    %314 = vmatprep.subr.mxu0 0.0
    %315 = vmatpush2.msra.mxu0 0.0
    %316 = vmatprep.subr.mxu0 0.0
    %317 = vmatpush2.msra.mxu0 0.0
    %318 = vmatprep.subr.mxu0 0.0
    %319 = vmatpush2.msra.mxu0 0.0
    %320 = vmatprep.subr.mxu0 0.0
    %321 = vmatpush2.msra.mxu0 0.0
    %322 = vmatprep.subr.mxu0 0.0
    %323 = vmatpush2.msra.mxu0 0.0
    %324 = vmatprep.subr.mxu0 0.0
    %325 = vmatpush2.msra.mxu0 0.0
    %326 = vmatprep.subr.mxu0 0.0
    %327 = vmatpush2.msra.mxu0 0.0
    %328 = vmatprep.subr.mxu0 0.0
    %329 = vmatpush2.msra.mxu0 0.0
    %330 = vmatprep.subr.mxu0 0.0
    %331 = vmatpush2.msra.mxu0 0.0
    %332 = vmatprep.subr.mxu0 0.0
    %333 = vmatpush2.msra.mxu0 0.0
    %334 = vmatprep.subr.mxu0 0.0
    %335 = vmatpush2.msra.mxu0 0.0
    %336 = vmatprep.subr.mxu0 0.0
    %337 = vmatpush2.msra.mxu0 0.0
    %338 = vmatprep.subr.mxu0 0.0
    %339 = vmatpush2.msra.mxu0 0.0
    %340 = vmatprep.subr.mxu0 0.0
    %341 = vmatpush2.msra.mxu0 0.0
    %342 = vmatprep.mubr.f32.mxu0 0.0
    %343 = vmatmul.mubr.f32.gmra.mxu0 %v256
    %v344 = vpop.f32.mrf.mxu0
    %v345 = vadd.f32 %v277, %v344
    %v346 = vpop.f32.mrf.mxu0
    %347 = vdwg.mxu0
    %v348 = vmax.f32 %v345, 0.0
    %v349 = vld [vmem:[#allocation7] sm:$0xff]
    %v350 = vld [vmem:[#allocation7 + $0x8] sm:$0xff]
    %v351 = vld [vmem:[#allocation9 + $0x8] sm:$0xff]
    %v352 = vld [vmem:[#allocation9 + $0x10] sm:$0xff]
    %354 = vset.pattern.permute.xlu0 0
    %355 = vperm.xlu0 %354, %v351
    %v356 = vpop.permute.xlu0 %355
    %359 = vset.pattern.permute.xlu0 0
    %360 = vperm.xlu0 %359, %v352
    %v361 = vpop.permute.xlu0 %360
    %363 = vmatprep.subr.mxu0 0.0
    %364 = vmatpush1.xpose.msra.mxu0 0.0
    %365 = vmatprep.subr.mxu0 0.0
    %366 = vmatpush1.xpose.msra.mxu0 0.0
    %367 = vmatprep.subr.mxu0 0.0
    %368 = vmatpush1.xpose.msra.mxu0 0.0
    %369 = vmatprep.subr.mxu0 0.0
    %370 = vmatpush1.xpose.msra.mxu0 0.0
    %371 = vmatprep.subr.mxu0 0.0
    %372 = vmatpush1.xpose.msra.mxu0 0.0
    %373 = vmatprep.subr.mxu0 0.0
    %374 = vmatpush1.xpose.msra.mxu0 0.0
    %375 = vmatprep.subr.mxu0 0.0
    %376 = vmatpush1.xpose.msra.mxu0 0.0
    %377 = vmatprep.subr.mxu0 0.0
    %378 = vmatpush1.xpose.msra.mxu0 0.0
    %379 = vmatprep.subr.mxu0 0.0
    %380 = vmatpush1.xpose.msra.mxu0 0.0
    %381 = vmatprep.subr.mxu0 0.0
    %382 = vmatpush1.xpose.msra.mxu0 0.0
    %383 = vmatprep.subr.mxu0 0.0
    %384 = vmatpush1.xpose.msra.mxu0 0.0
    %385 = vmatprep.subr.mxu0 0.0
    %386 = vmatpush1.xpose.msra.mxu0 0.0
    %387 = vmatprep.subr.mxu0 0.0
    %388 = vmatpush1.xpose.msra.mxu0 0.0
    %389 = vmatprep.subr.mxu0 0.0
    %390 = vmatpush1.xpose.msra.mxu0 0.0
    %391 = vmatprep.subr.mxu0 0.0
    %392 = vmatpush1.xpose.msra.mxu0 0.0
    %393 = vmatprep.subr.mxu0 0.0
    %394 = vmatpush1.xpose.msra.mxu0 %v348
    %395 = vmatprep.subr.mxu0 0.0
    %396 = vmatpush2.xpose.msra.mxu0 0.0
    %397 = vmatprep.subr.mxu0 0.0
    %398 = vmatpush2.xpose.msra.mxu0 0.0
    %399 = vmatprep.subr.mxu0 0.0
    %400 = vmatpush2.xpose.msra.mxu0 0.0
    %401 = vmatprep.subr.mxu0 0.0
    %402 = vmatpush2.xpose.msra.mxu0 0.0
    %403 = vmatprep.subr.mxu0 0.0
    %404 = vmatpush2.xpose.msra.mxu0 0.0
    %405 = vmatprep.subr.mxu0 0.0
    %406 = vmatpush2.xpose.msra.mxu0 0.0
    %407 = vmatprep.subr.mxu0 0.0
    %408 = vmatpush2.xpose.msra.mxu0 0.0
    %409 = vmatprep.subr.mxu0 0.0
    %410 = vmatpush2.xpose.msra.mxu0 0.0
    %411 = vmatprep.subr.mxu0 0.0
    %412 = vmatpush2.xpose.msra.mxu0 0.0
    %413 = vmatprep.subr.mxu0 0.0
    %414 = vmatpush2.xpose.msra.mxu0 0.0
    %415 = vmatprep.subr.mxu0 0.0
    %416 = vmatpush2.xpose.msra.mxu0 0.0
    %417 = vmatprep.subr.mxu0 0.0
    %418 = vmatpush2.xpose.msra.mxu0 0.0
    %419 = vmatprep.subr.mxu0 0.0
    %420 = vmatpush2.xpose.msra.mxu0 0.0
    %421 = vmatprep.subr.mxu0 0.0
    %422 = vmatpush2.xpose.msra.mxu0 0.0
    %423 = vmatprep.subr.mxu0 0.0
    %424 = vmatpush2.xpose.msra.mxu0 0.0
    %425 = vmatprep.subr.mxu0 0.0
    %426 = vmatpush2.xpose.msra.mxu0 0.0
    %427 = vmatprep.mubr.f32.mxu0 0.0
    %428 = vmatmul.mubr.f32.gmra.mxu0 %v349
    %v429 = vpop.f32.mrf.mxu0
    %v430 = vadd.f32 %v356, %v429
    %v431 = vpop.f32.mrf.mxu0
    %432 = vmatprep.mubr.f32.mxu0 0.0
    %433 = vmatmul.mubr.f32.gmra.mxu0 %v350
    %v434 = vpop.f32.mrf.mxu0
    %v435 = vadd.f32 %v361, %v434
    %v436 = vpop.f32.mrf.mxu0
    %437 = vdwg.mxu0
    %vm438 = vcmask 64512
    %439 = vst.msk [vmem:[%s7] sm:$0xff] %vm438, %v430
    %440 = vst.msk [vmem:[%s7 + $0x8] sm:$0xff] %vm438, %v435
    // Predicated region
    $region50: #{one_step_model_fc_forward.1} parent=1 // pred_check
      _
    $region51: #{one_step_model_fc_forward.1} parent=1 // pred_check_branch
      %442 = sbr.rel (0) target = $region53
    $region52: #{one_step_model_fc_forward.1} parent=1 // pred_region
      _
    $region53: #{one_step_model_fc_forward.1} parent=1 // pred_fallthru
      _
    // Predicated region
    $region54: #{one_step_model_fc_forward.1} parent=1 // pred_check
      _
    $region55: #{one_step_model_fc_forward.1} parent=1 // pred_check_branch
      %444 = sbr.rel (0) target = $region57
    $region56: #{one_step_model_fc_forward.1} parent=1 // pred_region
      _
    $region57: #{one_step_model_fc_forward.1} parent=1 // pred_fallthru
      _
    %445 = vsyncpa [#allocation3], 1
    %446 = vsyncpa [#allocation5], 1
    %447 = vsyncpa [#allocation8], 1

</llo_original>
